<compile_context>
chip_gen: v7x
topology: tpu7x:2x2x1
jax: 0.10.0
libtpu: 0.0.40
codegen_flags: <defaults>
</compile_context>

<pallas_src>
from functools import partial

import jax
import jax.numpy as jnp
from jax import lax
from jax.experimental import pallas as pl
from jax.experimental.pallas import tpu as pltpu


# --------------------------------- small helpers ----------------------------------

def _itemsize(dtype):
    return jnp.dtype(dtype).itemsize


def _vmem_limit(block_bytes, scratch_bytes):
    """Scoped-VMEM limit derived from actual block + scratch sizes (review: do not blanket
    64 MiB).  Inputs/outputs are double-buffered; add headroom; cap well below v7x's
    64 MiB / TensorCore physical VMEM."""
    need = 2 * int(block_bytes) + int(scratch_bytes) + (4 << 20)
    return int(min(max(need, 16 << 20), 48 << 20))


def _compiler_params(semantics, block_bytes, scratch_bytes):
    return pltpu.CompilerParams(
        dimension_semantics=semantics,
        vmem_limit_bytes=_vmem_limit(block_bytes, scratch_bytes),
    )


def _group_matrices(C, num_groups):
    assert C % num_groups == 0, (C, num_groups)
    gidx = jnp.arange(C) // (C // num_groups)
    mr = (gidx[:, None] == jnp.arange(num_groups)[None, :]).astype(jnp.float32)
    return mr, mr.T                       # (C, G) reduce, (G, C) broadcast


def _band_size(H, band_rows):
    if band_rows is None or band_rows >= H or H % band_rows != 0:
        return H
    return band_rows


def _halo_specs(H, W, C, Hb):
    """Body block + 1-row top/bottom halo blocks.  Row indices clamp at the image edges;
    the kernel zeroes the clamped halo rows (SAME padding)."""
    return [
        pl.BlockSpec((1, 1, W, C), lambda b, r: (b, jnp.maximum(r * Hb - 1, 0), 0, 0)),
        pl.BlockSpec((1, Hb, W, C), lambda b, r: (b, r, 0, 0)),
        pl.BlockSpec((1, 1, W, C), lambda b, r: (b, jnp.minimum(r * Hb + Hb, H - 1), 0, 0)),
    ]


# --------------------------- GroupNorm statistics kernel ---------------------------

def _gn_stats_kernel(x_ref, g_ref, b_ref, mr_ref, mb_ref, o_ref, acc_ref, *,
                     eps, n_per_group):
    """Band-accumulating GroupNorm stats.  Emits, per (batch, channel), the fused affine
    y = x*scale + shift implementing GroupNorm*gamma + beta.
    o_ref block is (1, 2, C): row0 = scale, row1 = shift."""
    r = pl.program_id(1)

    @pl.when(r == 0)
    def _init():
        acc_ref[...] = jnp.zeros_like(acc_ref)

    C = x_ref.shape[3]
    x = x_ref[0].reshape(-1, C).astype(jnp.float32)                 # (band*W, C)
    s = jnp.sum(x, axis=0, keepdims=True)
    s2 = jnp.sum(x * x, axis=0, keepdims=True)
    acc_ref[...] += jnp.concatenate([s, s2], axis=0)                # (2, C)

    @pl.when(r == pl.num_programs(1) - 1)
    def _finalize():
        # sum and sum-of-squares through the MXU together: (2, C) @ (C, G).
        gsum = jnp.dot(acc_ref[...], mr_ref[...], preferred_element_type=jnp.float32)
        mean_g = gsum[0:1, :] / n_per_group
        # One-pass variance in f32, clamped so rsqrt never sees a tiny negative.
        # TODO(synk): switch to mean-subtracted (two-sweep) variance at production scale.
        var_g = jnp.maximum(gsum[1:2, :] / n_per_group - mean_g * mean_g, 0.0)
        inv_g = lax.rsqrt(var_g + eps)
        # Broadcast per-group (mean, inv) back to channels: (2, G) @ (G, C).
        mi = jnp.dot(jnp.concatenate([mean_g, inv_g], axis=0), mb_ref[...],
                     preferred_element_type=jnp.float32)
        scale = mi[1:2, :] * g_ref[...]                             # inv * gamma
        shift = b_ref[...] - mi[0:1, :] * scale                     # beta - mean*inv*gamma
        o_ref[0] = jnp.concatenate([scale, shift], axis=0)


def gn_scale_shift(x, gamma, beta, *, num_groups=32, eps=1e-6, band_rows=8):
    B, H, W, C = x.shape
    Hb = _band_size(H, band_rows)
    nb = H // Hb
    mr, mb = _group_matrices(C, num_groups)
    g = gamma.reshape(1, C).astype(jnp.float32)
    bta = beta.reshape(1, C).astype(jnp.float32)

    act = _itemsize(x.dtype)
    block_bytes = Hb * W * C * act + 2 * C * num_groups * 4 + 6 * C * 4
    cost = pl.CostEstimate(
        flops=int(3 * B * H * W * C),
        transcendentals=0,
        bytes_accessed=int(B * H * W * C * act + B * 2 * C * 4),
    )
    return pl.pallas_call(
        partial(_gn_stats_kernel, eps=eps,
                n_per_group=float(H * W * (C // num_groups))),
        out_shape=jax.ShapeDtypeStruct((B, 2, C), jnp.float32),
        grid=(B, nb),
        in_specs=[
            pl.BlockSpec((1, Hb, W, C), lambda b, r: (b, r, 0, 0)),
            pl.BlockSpec((1, C), lambda b, r: (0, 0)),
            pl.BlockSpec((1, C), lambda b, r: (0, 0)),
            pl.BlockSpec((C, num_groups), lambda b, r: (0, 0)),
            pl.BlockSpec((num_groups, C), lambda b, r: (0, 0)),
        ],
        out_specs=pl.BlockSpec((1, 2, C), lambda b, r: (b, 0, 0)),
        scratch_shapes=[pltpu.VMEM((2, C), jnp.float32)],
        compiler_params=_compiler_params(("parallel", "arbitrary"),
                                         block_bytes, 2 * C * 4),
        cost_estimate=cost,
    )(x, g, bta, mr, mb)


# ----------------------------- in-kernel conv helpers ------------------------------

def _fill_halo_buffer(yp_ref, top_ref, body_ref, bot_ref, fn, r, nb):
    """Assemble the (band+2, W+2, C) zero-padded slab.  Only the interior + halo rows are
    (re)written each step; the two border columns are cleared each step (cheap, and safe
    when the grid is partitioned across TensorCores -- scratch is per-core)."""
    Hb, W, C = body_ref.shape[1], body_ref.shape[2], body_ref.shape[3]
    dt = yp_ref.dtype
    zcol = jnp.zeros((Hb + 2, 1, C), dt)
    yp_ref[:, 0:1, :] = zcol
    yp_ref[:, W + 1:W + 2, :] = zcol
    yp_ref[1:Hb + 1, 1:W + 1, :] = fn(body_ref[0]).astype(dt)
    top = jnp.where(r == 0, 0.0, fn(top_ref[0]))          # SAME padding at image top
    bot = jnp.where(r == nb - 1, 0.0, fn(bot_ref[0]))     # SAME padding at image bottom
    yp_ref[0:1, 1:W + 1, :] = top.astype(dt)
    yp_ref[Hb + 1:Hb + 2, 1:W + 1, :] = bot.astype(dt)


def _conv3x3_taps(yp_ref, w_ref, Hb, W, C, Cout):
    """3x3 SAME conv as 9 accumulating tap matmuls (K = C) -- no im2col slab.
    yp_ref: (band+2, W+2, C) bf16 halo buffer; w_ref: (9*C, Cout) bf16, HWIO tap order."""
    acc = jnp.zeros((Hb * W, Cout), jnp.float32)
    for k in range(9):                                     # static unroll over taps
        dy, dx = divmod(k, 3)
        tap = yp_ref[dy:dy + Hb, dx:dx + W, :].reshape(Hb * W, C)
        acc = acc + jnp.dot(tap, w_ref[k * C:(k + 1) * C, :],
                            preferred_element_type=jnp.float32)
    return acc


# ----------------------------------- conv kernels ----------------------------------

def _gn_conv1_kernel(top_ref, body_ref, bot_ref, ab_ref, w_ref, bias_ref, o_ref, yp_ref):
    """norm1 (precomputed scale/shift) + SiLU + conv1 + per-batch (conv1_b + temb) bias."""
    Hb, W, C = body_ref.shape[1], body_ref.shape[2], body_ref.shape[3]
    Cout = o_ref.shape[3]
    r = pl.program_id(1)
    nb = pl.num_programs(1)
    scale = ab_ref[0, 0:1, :]
    shift = ab_ref[0, 1:2, :]

    def gn_silu(v):
        # f32 elementwise chain (safe on v5e; see TODO for bf16 on v6e/v7x).
        y = v.astype(jnp.float32) * scale + shift
        return y * jax.nn.sigmoid(y)

    _fill_halo_buffer(yp_ref, top_ref, body_ref, bot_ref, gn_silu, r, nb)
    acc = _conv3x3_taps(yp_ref, w_ref, Hb, W, C, Cout) + bias_ref[0]
    o_ref[0] = acc.reshape(Hb, W, Cout).astype(o_ref.dtype)


def _gn_conv2_kernel(*refs, shortcut):
    """norm2 (precomputed scale/shift) + SiLU + (eval-mode dropout = identity) + conv2
    + bias + residual shortcut, fused in one pass over the band."""
    if shortcut == "conv":
        (top_ref, body_ref, bot_ref, ab_ref, w_ref, bias_ref,
         xtop_ref, xbody_ref, xbot_ref, scw_ref, o_ref, yp_ref, ypx_ref) = refs
    elif shortcut == "nin":
        (top_ref, body_ref, bot_ref, ab_ref, w_ref, bias_ref,
         xbody_ref, ninw_ref, o_ref, yp_ref) = refs
    else:  # identity
        (top_ref, body_ref, bot_ref, ab_ref, w_ref, bias_ref,
         res_ref, o_ref, yp_ref) = refs

    Hb, W, C = body_ref.shape[1], body_ref.shape[2], body_ref.shape[3]
    Cout = o_ref.shape[3]
    r = pl.program_id(1)
    nb = pl.num_programs(1)
    scale = ab_ref[0, 0:1, :]
    shift = ab_ref[0, 1:2, :]

    def gn_silu(v):
        y = v.astype(jnp.float32) * scale + shift
        return y * jax.nn.sigmoid(y)

    _fill_halo_buffer(yp_ref, top_ref, body_ref, bot_ref, gn_silu, r, nb)
    acc = _conv3x3_taps(yp_ref, w_ref, Hb, W, C, Cout) + bias_ref[0]

    if shortcut == "identity":
        res = res_ref[0].reshape(Hb * W, Cout).astype(jnp.float32)
    elif shortcut == "nin":
        Cx = xbody_ref.shape[3]
        xres = xbody_ref[0].reshape(Hb * W, Cx).astype(jnp.bfloat16)
        res = jnp.dot(xres, ninw_ref[...], preferred_element_type=jnp.float32)
    else:  # fused 3x3 conv shortcut (x never round-trips HBM as a separate tensor)
        Cx = xbody_ref.shape[3]
        _fill_halo_buffer(ypx_ref, xtop_ref, xbody_ref, xbot_ref,
                          lambda v: v.astype(jnp.float32), r, nb)
        res = _conv3x3_taps(ypx_ref, scw_ref, Hb, W, Cx, Cout)

    o_ref[0] = (acc + res).reshape(Hb, W, Cout).astype(o_ref.dtype)


# ----------------------------------- wrappers --------------------------------------

def gn_silu_conv1(x, ab, w_hwio, bias_bc, *, band_rows=8, out_dtype=None):
    """conv1(SiLU(GN1(x))) + per-batch bias (conv1_b + temb projection), band-tiled."""
    B, H, W, Cin = x.shape
    Cout = w_hwio.shape[-1]
    Hb = _band_size(H, band_rows)
    nb = H // Hb
    out_dtype = out_dtype if out_dtype is not None else x.dtype
    w = w_hwio.reshape(9 * Cin, Cout).astype(jnp.bfloat16)
    bias = bias_bc.reshape(B, 1, Cout).astype(jnp.float32)

    in_specs = _halo_specs(H, W, Cin, Hb) + [
        pl.BlockSpec((1, 2, Cin), lambda b, r: (b, 0, 0)),
        pl.BlockSpec((9 * Cin, Cout), lambda b, r: (0, 0)),
        pl.BlockSpec((1, 1, Cout), lambda b, r: (b, 0, 0)),
    ]
    act = _itemsize(x.dtype)
    outsz = _itemsize(out_dtype)
    block_bytes = ((Hb + 2) * W * Cin * act + 2 * Cin * 4 + 9 * Cin * Cout * 2
                   + Cout * 4 + Hb * W * Cout * outsz)
    scratch_bytes = (Hb + 2) * (W + 2) * Cin * 2
    cost = pl.CostEstimate(
        flops=int(2 * 9 * B * H * W * Cin * Cout + 4 * B * H * W * Cin),
        transcendentals=int(B * H * W * Cin),
        bytes_accessed=int(B * H * W * (Cin * act + Cout * outsz)
                           + 9 * Cin * Cout * 2 + B * Cout * 4),
    )
    # NOTE: at demo channel counts Cout < 128 the output stores are lane-masked; at
    # production channel counts (>=128) the out block is lane-dense.
    return pl.pallas_call(
        _gn_conv1_kernel,
        out_shape=jax.ShapeDtypeStruct((B, H, W, Cout), out_dtype),
        grid=(B, nb),
        in_specs=in_specs,
        out_specs=pl.BlockSpec((1, Hb, W, Cout), lambda b, r: (b, r, 0, 0)),
        scratch_shapes=[pltpu.VMEM((Hb + 2, W + 2, Cin), jnp.bfloat16)],
        compiler_params=_compiler_params(("parallel", "parallel"),
                                         block_bytes, scratch_bytes),
        cost_estimate=cost,
    )(x, x, x, ab, w, bias)


def gn_silu_conv2_residual(h, ab, w_hwio, bias_c, shortcut, *, x, nin_w=None, sc_w=None,
                           band_rows=8, out_dtype=None):
    """conv2(SiLU(GN2(h))) + bias + residual (identity / 1x1 nin / 3x3 conv shortcut),
    fused in one band-tiled kernel.  bias_c must already fold the shortcut's bias."""
    B, H, W, C = h.shape
    Cout = w_hwio.shape[-1]
    Hb = _band_size(H, band_rows)
    nb = H // Hb
    out_dtype = out_dtype if out_dtype is not None else h.dtype
    w = w_hwio.reshape(9 * C, Cout).astype(jnp.bfloat16)
    bias = bias_c.reshape(1, 1, Cout).astype(jnp.float32)

    in_specs = _halo_specs(H, W, C, Hb) + [
        pl.BlockSpec((1, 2, C), lambda b, r: (b, 0, 0)),
        pl.BlockSpec((9 * C, Cout), lambda b, r: (0, 0)),
        pl.BlockSpec((1, 1, Cout), lambda b, r: (0, 0, 0)),
    ]
    args = [h, h, h, ab, w, bias]
    scratch = [pltpu.VMEM((Hb + 2, W + 2, C), jnp.bfloat16)]
    scratch_bytes = (Hb + 2) * (W + 2) * C * 2

    act_h = _itemsize(h.dtype)
    act_x = _itemsize(x.dtype)
    Cx = x.shape[-1]
    if shortcut == "identity":
        in_specs.append(pl.BlockSpec((1, Hb, W, Cout), lambda b, r: (b, r, 0, 0)))
        args.append(x)
        extra_block = Hb * W * Cout * act_x
        extra_flops = B * H * W * Cout
    elif shortcut == "nin":
        in_specs += [pl.BlockSpec((1, Hb, W, Cx), lambda b, r: (b, r, 0, 0)),
                     pl.BlockSpec((Cx, Cout), lambda b, r: (0, 0))]
        args += [x, nin_w.astype(jnp.bfloat16)]
        extra_block = Hb * W * Cx * act_x + Cx * Cout * 2
        extra_flops = 2 * B * H * W * Cx * Cout
    elif shortcut == "conv":
        in_specs += _halo_specs(H, W, Cx, Hb)
        in_specs.append(pl.BlockSpec((9 * Cx, Cout), lambda b, r: (0, 0)))
        args += [x, x, x, sc_w.reshape(9 * Cx, Cout).astype(jnp.bfloat16)]
        scratch.append(pltpu.VMEM((Hb + 2, W + 2, Cx), jnp.bfloat16))
        scratch_bytes += (Hb + 2) * (W + 2) * Cx * 2
        extra_block = (Hb + 2) * W * Cx * act_x + 9 * Cx * Cout * 2
        extra_flops = 2 * 9 * B * H * W * Cx * Cout
    else:
        raise ValueError(shortcut)

    outsz = _itemsize(out_dtype)
    block_bytes = ((Hb + 2) * W * C * act_h + 2 * C * 4 + 9 * C * Cout * 2 + Cout * 4
                   + Hb * W * Cout * outsz + extra_block)
    cost = pl.CostEstimate(
        flops=int(2 * 9 * B * H * W * C * Cout + 4 * B * H * W * C + extra_flops),
        transcendentals=int(B * H * W * C),
        bytes_accessed=int(B * H * W * (C * act_h + Cx * act_x + Cout * outsz)
                           + 9 * C * Cout * 2),
    )
    return pl.pallas_call(
        partial(_gn_conv2_kernel, shortcut=shortcut),
        out_shape=jax.ShapeDtypeStruct((B, H, W, Cout), out_dtype),
        grid=(B, nb),
        in_specs=in_specs,
        out_specs=pl.BlockSpec((1, Hb, W, Cout), lambda b, r: (b, r, 0, 0)),
        scratch_shapes=scratch,
        compiler_params=_compiler_params(("parallel", "parallel"),
                                         block_bytes, scratch_bytes),
        cost_estimate=cost,
    )(*args)


# ------------------------------ ResnetBlock forward --------------------------------

def resnet_block_forward(x_nchw, temb, params, *, use_conv_shortcut=False,
                         num_groups=32, eps=1e-6, band_rows=8,
                         act_dtype=jnp.bfloat16):
    """Eval-mode ResnetBlock forward (dropout = identity).  act_dtype controls the HBM
    dtype of activations between the fused kernels (bf16 default; f32 for full precision)."""
    out_dtype = x_nchw.dtype
    x = jnp.transpose(x_nchw, (0, 2, 3, 1))                          # NCHW -> NHWC
    B, H, W, Cin = x.shape
    Cout = params["conv1_w"].shape[-1]
    x_act = x.astype(act_dtype)

    # temb projection folded into conv1's per-batch bias (tiny; plain JAX).
    t = temb * jax.nn.sigmoid(temb)                                  # nonlinearity(temb)
    bias1 = (t @ params["temb_w"] + params["temb_b"]
             + params["conv1_b"][None, :]).astype(jnp.float32)       # (B, Cout)

    # norm1 stats -> fused GN1+SiLU+conv1 (+temb bias)
    ab1 = gn_scale_shift(x_act, params["norm1_g"], params["norm1_b"],
                         num_groups=num_groups, eps=eps, band_rows=band_rows)
    h = gn_silu_conv1(x_act, ab1, params["conv1_w"], bias1,
                      band_rows=band_rows, out_dtype=act_dtype)

    # norm2 stats -> fused GN2+SiLU+(dropout=identity)+conv2 + residual shortcut
    ab2 = gn_scale_shift(h, params["norm2_g"], params["norm2_b"],
                         num_groups=num_groups, eps=eps, band_rows=band_rows)

    if Cin != Cout:
        if use_conv_shortcut:
            bias2 = params["conv2_b"] + params["convsc_b"]
            out = gn_silu_conv2_residual(h, ab2, params["conv2_w"], bias2, "conv",
                                         x=x_act, sc_w=params["convsc_w"],
                                         band_rows=band_rows, out_dtype=out_dtype)
        else:
            bias2 = params["conv2_b"] + params["nin_b"]
            out = gn_silu_conv2_residual(h, ab2, params["conv2_w"], bias2, "nin",
                                         x=x_act, nin_w=params["nin_w"],
                                         band_rows=band_rows, out_dtype=out_dtype)
    else:
        out = gn_silu_conv2_residual(h, ab2, params["conv2_w"], params["conv2_b"],
                                     "identity", x=x_act,
                                     band_rows=band_rows, out_dtype=out_dtype)

    return jnp.transpose(out, (0, 3, 1, 2)).astype(out_dtype)        # NHWC -> NCHW


# ------------------------------ pure-JAX reference ---------------------------------

def ref_forward(x_nchw, temb, params, use_conv_shortcut=False, num_groups=32, eps=1e-6):
    x = jnp.transpose(x_nchw, (0, 2, 3, 1))

    def gn(v, g, b):
        B, H, W, C = v.shape
        vg = v.reshape(B, H, W, num_groups, C // num_groups)
        mean = vg.mean(axis=(1, 2, 4), keepdims=True)
        var = ((vg - mean) ** 2).mean(axis=(1, 2, 4), keepdims=True)
        y = ((vg - mean) / jnp.sqrt(var + eps)).reshape(B, H, W, C)
        return y * g + b

    def silu(v):
        return v * jax.nn.sigmoid(v)

    def conv(v, w, b, pad):
        y = lax.conv_general_dilated(v, w, (1, 1), [(pad, pad), (pad, pad)],
                                     dimension_numbers=("NHWC", "HWIO", "NHWC"))
        return y + b

    h = silu(gn(x, params["norm1_g"], params["norm1_b"]))
    h = conv(h, params["conv1_w"], params["conv1_b"], 1)
    tb = silu(temb) @ params["temb_w"] + params["temb_b"]
    h = h + tb[:, None, None, :]
    h = silu(gn(h, params["norm2_g"], params["norm2_b"]))
    h = conv(h, params["conv2_w"], params["conv2_b"], 1)
    Cin, Cout = x.shape[-1], h.shape[-1]
    if Cin != Cout:
        if use_conv_shortcut:
            xs = conv(x, params["convsc_w"], params["convsc_b"], 1)
        else:
            xs = conv(x, params["nin_w"][None, None], params["nin_b"], 0)
    else:
        xs = x
    return jnp.transpose(xs + h, (0, 3, 1, 2))


# ---------------------------------------- main -------------------------------------

if __name__ == "__main__":
    B, H, W, T = 2, 16, 16, 128           # small demo shapes; GroupNorm(32) => C % 32 == 0

    def make_params(k, cin, cout):
        ks = list(jax.random.split(k, 16))
        f32 = jnp.float32
        p = {
            "norm1_g": 1.0 + 0.05 * jax.random.normal(ks[0], (cin,), f32),
            "norm1_b": 0.05 * jax.random.normal(ks[1], (cin,), f32),
            "conv1_w": 0.1 * jax.random.normal(ks[2], (3, 3, cin, cout), f32),
            "conv1_b": 0.02 * jax.random.normal(ks[3], (cout,), f32),
            "temb_w": 0.1 * jax.random.normal(ks[4], (T, cout), f32),
            "temb_b": 0.02 * jax.random.normal(ks[5], (cout,), f32),
            "norm2_g": 1.0 + 0.05 * jax.random.normal(ks[6], (cout,), f32),
            "norm2_b": 0.05 * jax.random.normal(ks[7], (cout,), f32),
            "conv2_w": 0.1 * jax.random.normal(ks[8], (3, 3, cout, cout), f32),
            "conv2_b": 0.02 * jax.random.normal(ks[9], (cout,), f32),
            "nin_w": 0.1 * jax.random.normal(ks[10], (cin, cout), f32),
            "nin_b": 0.02 * jax.random.normal(ks[11], (cout,), f32),
            "convsc_w": 0.1 * jax.random.normal(ks[12], (3, 3, cin, cout), f32),
            "convsc_b": 0.02 * jax.random.normal(ks[13], (cout,), f32),
        }
        return p, ks[14], ks[15]

    key = jax.random.PRNGKey(0)
    cases = [
        ("identity-shortcut", 32, 32, False),
        ("nin-shortcut", 32, 64, False),
        ("conv-shortcut", 32, 64, True),
    ]
    for i, (name, cin, cout, use_cs) in enumerate(cases):
        params, kx, kt = make_params(jax.random.fold_in(key, i), cin, cout)
        x = jax.random.normal(kx, (B, cin, H, W), jnp.float32)       # NCHW, like PyTorch
        temb = jax.random.normal(kt, (B, T), jnp.float32)
        ref = jax.block_until_ready(ref_forward(x, temb, params, use_conv_shortcut=use_cs))

        # f32 activation I/O: only the matmul operands are bf16 (f32 accumulation/stats),
        # so the expected max error is a few 1e-2 at these magnitudes.
        out = jax.block_until_ready(resnet_block_forward(
            x, temb, params, use_conv_shortcut=use_cs, act_dtype=jnp.float32))
        assert out.shape == (B, cout, H, W), (name, out.shape)
        err = float(jnp.max(jnp.abs(out - ref)))
        assert jnp.allclose(out, ref, atol=5e-2, rtol=2e-2), (name, "f32", err)

        if name == "nin-shortcut":
            # bf16 activation I/O (default perf config; halves HBM traffic on v5e/v6e).
            out_bf = jax.block_until_ready(resnet_block_forward(
                x, temb, params, use_conv_shortcut=use_cs, act_dtype=jnp.bfloat16))
            err_bf = float(jnp.max(jnp.abs(out_bf - ref)))
            assert jnp.allclose(out_bf, ref, atol=2e-1, rtol=5e-2), (name, "bf16", err_bf)

    print("KERNEL_OK")
</pallas_src>

<mosaic_0001>
module attributes {stable_mosaic.version = 11 : i64} {
  func.func @_gn_stats_kernel(%arg0: i32, %arg1: i32, %arg2: memref<1x8x16x32xf32, #tpu.memory_space<vmem>>, %arg3: memref<1x32xf32, #tpu.memory_space<vmem>>, %arg4: memref<1x32xf32, #tpu.memory_space<vmem>>, %arg5: memref<32x32xf32, #tpu.memory_space<vmem>>, %arg6: memref<32x32xf32, #tpu.memory_space<vmem>>, %arg7: memref<1x2x32xf32, #tpu.memory_space<vmem>>, %arg8: memref<2x32xf32, #tpu.memory_space<vmem>>) attributes {dimension_semantics = [#tpu.dimension_semantics<parallel>, #tpu.dimension_semantics<arbitrary>], iteration_bounds = array<i64: 2, 2>, scalar_prefetch = 0 : i64, scratch_operands = 1 : i64, tpu.core_type = #tpu.core_type<tc>, window_params = [{transform_indices = @transform_0, window_bounds = array<i64: 1, 8, 16, 32>}, {pipeline_mode = #tpu.pipeline_mode<synchronous>, transform_indices = @transform_1, window_bounds = array<i64: 1, 32>}, {pipeline_mode = #tpu.pipeline_mode<synchronous>, transform_indices = @transform_2, window_bounds = array<i64: 1, 32>}, {pipeline_mode = #tpu.pipeline_mode<synchronous>, transform_indices = @transform_3, window_bounds = array<i64: 32, 32>}, {pipeline_mode = #tpu.pipeline_mode<synchronous>, transform_indices = @transform_4, window_bounds = array<i64: 32, 32>}, {transform_indices = @transform_5, window_bounds = array<i64: 1, 2, 32>}]} {
    %c0_i32 = arith.constant 0 : i32
    %0 = arith.cmpi eq, %arg1, %c0_i32 : i32
    %1 = arith.extui %0 : i1 to i32
    %c0_i32_0 = arith.constant 0 : i32
    %2 = arith.cmpi ne, %1, %c0_i32_0 : i32
    scf.if %2 {
      %cst_10 = arith.constant 0.000000e+00 : f32
      %18 = vector.broadcast %cst_10 : f32 to vector<2x32xf32>
      %c0_11 = arith.constant 0 : index
      %c0_12 = arith.constant 0 : index
      %19 = vector.load %arg8[%c0_11, %c0_12] : memref<2x32xf32, #tpu.memory_space<vmem>>, vector<2x32xf32>
      tpu.vector_store %arg8[%c0_11, %c0_12], %18 {strides = array<i32>} : memref<2x32xf32, #tpu.memory_space<vmem>>, vector<2x32xf32>,
    } else {
    }
    %c0 = arith.constant 0 : index
    %c0_1 = arith.constant 0 : index
    %c0_2 = arith.constant 0 : index
    %c0_3 = arith.constant 0 : index
    %3 = vector.load %arg2[%c0, %c0_1, %c0_2, %c0_3] : memref<1x8x16x32xf32, #tpu.memory_space<vmem>>, vector<1x8x16x32xf32>
    %4 = vector.shape_cast %3 : vector<1x8x16x32xf32> to vector<8x16x32xf32>
    %5 = vector.shape_cast %4 : vector<8x16x32xf32> to vector<128x32xf32>
    %cst = arith.constant dense<0.000000e+00> : vector<32xf32>
    %6 = vector.multi_reduction <add>, %5, %cst [0] : vector<128x32xf32> to vector<32xf32>
    %7 = vector.shape_cast %6 : vector<32xf32> to vector<1x32xf32>
    %8 = arith.mulf %5, %5 : vector<128x32xf32>
    %cst_4 = arith.constant dense<0.000000e+00> : vector<32xf32>
    %9 = vector.multi_reduction <add>, %8, %cst_4 [0] : vector<128x32xf32> to vector<32xf32>
    %10 = vector.shape_cast %9 : vector<32xf32> to vector<1x32xf32>
    %c0_5 = arith.constant 0 : index
    %c0_6 = arith.constant 0 : index
    %11 = vector.load %arg8[%c0_5, %c0_6] : memref<2x32xf32, #tpu.memory_space<vmem>>, vector<2x32xf32>
    %12 = tpu.concatenate %7, %10 in 0 : vector<1x32xf32>, vector<1x32xf32> -> vector<2x32xf32>
    %13 = arith.addf %11, %12 : vector<2x32xf32>
    %c0_7 = arith.constant 0 : index
    %c0_8 = arith.constant 0 : index
    %14 = vector.load %arg8[%c0_7, %c0_8] : memref<2x32xf32, #tpu.memory_space<vmem>>, vector<2x32xf32>
    tpu.vector_store %arg8[%c0_7, %c0_8], %13 {strides = array<i32>} : memref<2x32xf32, #tpu.memory_space<vmem>>, vector<2x32xf32>,
    %c1_i32 = arith.constant 1 : i32
    %15 = arith.cmpi eq, %arg1, %c1_i32 : i32
    %16 = arith.extui %15 : i1 to i32
    %c0_i32_9 = arith.constant 0 : i32
    %17 = arith.cmpi ne, %16, %c0_i32_9 : i32
    scf.if %17 {
      %c0_10 = arith.constant 0 : index
      %c0_11 = arith.constant 0 : index
      %18 = vector.load %arg8[%c0_10, %c0_11] : memref<2x32xf32, #tpu.memory_space<vmem>>, vector<2x32xf32>
      %c0_12 = arith.constant 0 : index
      %c0_13 = arith.constant 0 : index
      %19 = vector.load %arg5[%c0_12, %c0_13] : memref<32x32xf32, #tpu.memory_space<vmem>>, vector<32x32xf32>
      %cst_14 = arith.constant dense<0.000000e+00> : vector<2x32xf32>
      %20 = tpu.matmul %18, %19, %cst_14 {dimension_numbers = #tpu.dot_dimension_numbers<[1], [0], [0], [1], [0, 0, 1, 1], [], []>} : vector<2x32xf32>, vector<32x32xf32>, vector<2x32xf32> -> vector<2x32xf32>
      %21 = vector.extract_strided_slice %20 {offsets = [0, 0], sizes = [1, 32], strides = [1, 1]} : vector<2x32xf32> to vector<1x32xf32>
      %cst_15 = arith.constant 2.560000e+02 : f32
      %22 = vector.broadcast %cst_15 : f32 to vector<1x32xf32>
      %23 = arith.divf %21, %22 : vector<1x32xf32>
      %24 = vector.extract_strided_slice %20 {offsets = [1, 0], sizes = [1, 32], strides = [1, 1]} : vector<2x32xf32> to vector<1x32xf32>
      %cst_16 = arith.constant 2.560000e+02 : f32
      %25 = vector.broadcast %cst_16 : f32 to vector<1x32xf32>
      %26 = arith.divf %24, %25 : vector<1x32xf32>
      %27 = arith.mulf %23, %23 : vector<1x32xf32>
      %28 = arith.subf %26, %27 : vector<1x32xf32>
      %cst_17 = arith.constant 0.000000e+00 : f32
      %29 = vector.broadcast %cst_17 : f32 to vector<1x32xf32>
      %30 = arith.maximumf %28, %29 : vector<1x32xf32>
      %cst_18 = arith.constant 9.99999997E-7 : f32
      %31 = vector.broadcast %cst_18 : f32 to vector<1x32xf32>
      %32 = arith.addf %30, %31 : vector<1x32xf32>
      %33 = math.rsqrt %32 : vector<1x32xf32>
      %34 = tpu.concatenate %23, %33 in 0 : vector<1x32xf32>, vector<1x32xf32> -> vector<2x32xf32>
      %c0_19 = arith.constant 0 : index
      %c0_20 = arith.constant 0 : index
      %35 = vector.load %arg6[%c0_19, %c0_20] : memref<32x32xf32, #tpu.memory_space<vmem>>, vector<32x32xf32>
      %cst_21 = arith.constant dense<0.000000e+00> : vector<2x32xf32>
      %36 = tpu.matmul %34, %35, %cst_21 {dimension_numbers = #tpu.dot_dimension_numbers<[1], [0], [0], [1], [0, 0, 1, 1], [], []>} : vector<2x32xf32>, vector<32x32xf32>, vector<2x32xf32> -> vector<2x32xf32>
      %37 = vector.extract_strided_slice %36 {offsets = [1, 0], sizes = [1, 32], strides = [1, 1]} : vector<2x32xf32> to vector<1x32xf32>
      %c0_22 = arith.constant 0 : index
      %c0_23 = arith.constant 0 : index
      %38 = vector.load %arg3[%c0_22, %c0_23] : memref<1x32xf32, #tpu.memory_space<vmem>>, vector<1x32xf32>
      %39 = arith.mulf %37, %38 : vector<1x32xf32>
      %c0_24 = arith.constant 0 : index
      %c0_25 = arith.constant 0 : index
      %40 = vector.load %arg4[%c0_24, %c0_25] : memref<1x32xf32, #tpu.memory_space<vmem>>, vector<1x32xf32>
      %41 = vector.extract_strided_slice %36 {offsets = [0, 0], sizes = [1, 32], strides = [1, 1]} : vector<2x32xf32> to vector<1x32xf32>
      %42 = arith.mulf %41, %39 : vector<1x32xf32>
      %43 = arith.subf %40, %42 : vector<1x32xf32>
      %44 = tpu.concatenate %39, %43 in 0 : vector<1x32xf32>, vector<1x32xf32> -> vector<2x32xf32>
      %c0_26 = arith.constant 0 : index
      %c0_27 = arith.constant 0 : index
      %c0_28 = arith.constant 0 : index
      %45 = vector.load %arg7[%c0_26, %c0_27, %c0_28] : memref<1x2x32xf32, #tpu.memory_space<vmem>>, vector<1x2x32xf32>
      %46 = vector.shape_cast %45 : vector<1x2x32xf32> to vector<2x32xf32>
      %47 = vector.shape_cast %44 : vector<2x32xf32> to vector<1x2x32xf32>
      tpu.vector_store %arg7[%c0_26, %c0_27, %c0_28], %47 {strides = array<i32>} : memref<1x2x32xf32, #tpu.memory_space<vmem>>, vector<1x2x32xf32>,
    } else {
    }
    return
  }
  func.func @transform_0(%arg0: i32, %arg1: i32) -> (i32, i32, i32, i32) {
    %c0_i32 = arith.constant 0 : i32
    %c0_i32_0 = arith.constant 0 : i32
    %c0_i32_1 = arith.constant 0 : i32
    return %arg0, %arg1, %c0_i32, %c0_i32_0 : i32, i32, i32, i32
  }
  func.func @transform_1(%arg0: i32, %arg1: i32) -> (i32, i32) {
    %c0_i32 = arith.constant 0 : i32
    %c0_i32_0 = arith.constant 0 : i32
    %c0_i32_1 = arith.constant 0 : i32
    return %c0_i32, %c0_i32_0 : i32, i32
  }
  func.func @transform_2(%arg0: i32, %arg1: i32) -> (i32, i32) {
    %c0_i32 = arith.constant 0 : i32
    %c0_i32_0 = arith.constant 0 : i32
    %c0_i32_1 = arith.constant 0 : i32
    return %c0_i32, %c0_i32_0 : i32, i32
  }
  func.func @transform_3(%arg0: i32, %arg1: i32) -> (i32, i32) {
    %c0_i32 = arith.constant 0 : i32
    %c0_i32_0 = arith.constant 0 : i32
    %c0_i32_1 = arith.constant 0 : i32
    return %c0_i32, %c0_i32_0 : i32, i32
  }
  func.func @transform_4(%arg0: i32, %arg1: i32) -> (i32, i32) {
    %c0_i32 = arith.constant 0 : i32
    %c0_i32_0 = arith.constant 0 : i32
    %c0_i32_1 = arith.constant 0 : i32
    return %c0_i32, %c0_i32_0 : i32, i32
  }
  func.func @transform_5(%arg0: i32, %arg1: i32) -> (i32, i32, i32) {
    %c0_i32 = arith.constant 0 : i32
    %c0_i32_0 = arith.constant 0 : i32
    %c0_i32_1 = arith.constant 0 : i32
    return %arg0, %c0_i32, %c0_i32_0 : i32, i32, i32
  }
}

</mosaic_0001>

<llo_original>
// kernel: tpu_custom_call.1
$region0: #{tpu_custom_call.1}
  #allocation0 [shape = 'u32[]', space=smem, size = 0x4, offset = 0x4, fixed_abs, tag = 'smem constant byte address 0x4 - core index']
  #allocation1 [shape = 'u32[144,128]{1,0:T(1,128)}', space=vmem, size = 0x12000, scoped, tag = 'internal scratch']
  #allocation2 [shape = 'f32[2,32]{1,0:T(2,128)}', space=vmem, size = 0x400, scoped, tag = 'scratch operand']
  %s0 = inlined_call_operand.hbm [shape: f32[2,16,16,32], index: 0, kind: input, shape index: {}]
  %s1 = inlined_call_operand.vmem [shape: f32[1,32], index: 1, kind: input, shape index: {}]
  %s2 = inlined_call_operand.vmem [shape: f32[1,32], index: 2, kind: input, shape index: {}]
  %s3 = inlined_call_operand.hbm [shape: f32[32,32], index: 3, kind: input, shape index: {}]
  %s4 = inlined_call_operand.hbm [shape: f32[32,32], index: 4, kind: input, shape index: {}]
  %s5 = inlined_call_operand.hbm [shape: f32[2,2,32], index: 5, kind: output, shape index: {}]
  %s6 = sld [smem:[#allocation0]]
  $region73: #{tpu_custom_call.1} parent=0
    _
  %s8 = ssub.s32 1, %s6
  %s9 = scalar_select 0, %s8, %s6
  $region1: #{tpu_custom_call.1} parent=0
    #allocation3 [shape = 'u8[131072]{0}', space=vmem, size = 0x20000, scoped, tag = 'input window, operand 0']
    #allocation4 [shape = 's32[2]{0}', space=sflag, size = 0x8, scoped, tag = 'scoped memory for tpu_custom_call.1']
    #allocation5 [shape = 's32[2]{0}', space=sflag, size = 0x8, scoped, tag = 'scoped memory for tpu_custom_call.1']
    #allocation6 [shape = 'u8[16384]{0}', space=vmem, size = 0x4000, scoped, tag = 'input window, operand 3, single buffered']
    #allocation7 [shape = 's32[1]{0}', space=sflag, size = 0x4, scoped, tag = 'scoped memory for tpu_custom_call.1']
    #allocation8 [shape = 'u8[16384]{0}', space=vmem, size = 0x4000, scoped, tag = 'input window, operand 4, single buffered']
    #allocation9 [shape = 'u8[2048]{0}', space=vmem, size = 0x800, scoped, tag = 'output window, operand 0']
    %10 = vsyncpa [#allocation4], 0
    %s11 = scalar_lea.sflag [#allocation4], 1
    %12 = vsyncpa %s11, 0
    %13 = vsyncpa [#allocation7], 0
    %14 = vsyncpa [#allocation5], 0
    %s15 = scalar_lea.sflag [#allocation5], 1
    %16 = vsyncpa %s15, 0
    loop: start=0, step=1, limit=6
    $region2: #{tpu_custom_call.1} parent=1 // loop_pre_header
      _
    $region3: #{tpu_custom_call.1} parent=1 // loop_header
      %s18 = sphi 0, %s22
      %p19 = scmp.ge.s32.totalorder %s18, 6
      %s25 = sphi 0, %s37
      %s26 = sphi 0, %s33
      %s27 = sphi 0, %s25
      %s28 = sphi 0, %s26
      %s29 = sphi 0, %s27
      %s30 = sphi 0, %s28
      %s42 = sphi 0, %s44
      %s45 = sphi 0, %s42
      %s46 = sphi 0, %s45
      %s62 = sphi 0, %s46
      %s66 = sphi 0, %s66
      %s68 = sphi 0, %s66
      %s69 = sphi 0, %s68
      %s83 = sphi 0, %s69
      %s87 = sphi 0, %s87
      %s89 = sphi 0, %s87
      %s90 = sphi 0, %s89
      %s104 = sphi 0, %s90
      %s108 = sphi 0, %s108
      %s110 = sphi 0, %s108
      %s111 = sphi 0, %s110
      %s125 = sphi 0, %s111
      %s129 = sphi 0, %s129
      %s131 = sphi 0, %s129
      %s132 = sphi 0, %s131
      %s146 = sphi 0, %s132
      %s152 = sphi 0, %s154
      %s155 = sphi 0, %s152
      %s156 = sphi 0, %s155
      %s172 = sphi 0, %s156
    $region4: #{tpu_custom_call.1} parent=1 // loop_header_branch
      %21 = sbr.rel (%p19) target = $region8
    $region5: #{tpu_custom_call.1} parent=1 // loop_body
      %s23 = ssub.s32 %s18, 1
      %s24 = ssub.s32 %s18, 2
      %s31 = sadd.s32 1, %s26
      %p32 = scmp.ge.s32.totalorder %s31, 2
      %s33 = scalar_select %p32, 0, %s31
      %s34 = sadd.s32 1, %s25
      %s35 = scalar_select %p32, %s34, %s25
      %p36 = scmp.ge.s32.totalorder %s35, 2
      %s37 = scalar_select %p36, 0, %s35
      %s38 = ssub.s32 %s25, %s37
      %s39 = ssub.s32 %s26, %s33
      %s40 = sor.u32 %s38, %s39
      %p41 = scmp.eq.s32.totalorder %s40, 0
      %s43 = sadd.s32 %s42, 1
      %s44 = scalar_select %p41, %s42, %s43
      %p47 = pneg %p41
      %p48 = scmp.eq.s32.totalorder %s18, 3
      %p49 = por %p47, %p48
      %p50 = scmp.ne.s32.totalorder %s42, %s45
      %p51 = scmp.eq.s32.totalorder %s18, 0
      %p52 = por %p50, %p51
      %p53 = scmp.ne.s32.totalorder %s42, %s45
      %p54 = scmp.eq.s32.totalorder %s23, 3
      %p55 = por %p53, %p54
      %p56 = scmp.ne.s32.totalorder %s45, %s46
      %p57 = scmp.eq.s32.totalorder %s23, 0
      %p58 = por %p56, %p57
      %p59 = scmp.ne.s32.totalorder %s45, %s46
      %p60 = scmp.eq.s32.totalorder %s24, 3
      %p61 = por %p59, %p60
      %p63 = scmp.ne.s32.totalorder %s46, %s62
      %p64 = scmp.eq.s32.totalorder %s24, 0
      %p65 = por %p63, %p64
      %s67 = sadd.s32 %s66, 1
      %p70 = scmp.eq.s32.totalorder %s18, 3
      %p71 = scmp.ne.s32.totalorder %s66, %s68
      %p72 = scmp.eq.s32.totalorder %s18, 0
      %p73 = por %p71, %p72
      %p74 = scmp.ne.s32.totalorder %s66, %s68
      %p75 = scmp.eq.s32.totalorder %s23, 3
      %p76 = por %p74, %p75
      %p77 = scmp.ne.s32.totalorder %s68, %s69
      %p78 = scmp.eq.s32.totalorder %s23, 0
      %p79 = por %p77, %p78
      %p80 = scmp.ne.s32.totalorder %s68, %s69
      %p81 = scmp.eq.s32.totalorder %s24, 3
      %p82 = por %p80, %p81
      %p84 = scmp.ne.s32.totalorder %s69, %s83
      %p85 = scmp.eq.s32.totalorder %s24, 0
      %p86 = por %p84, %p85
      %s88 = sadd.s32 %s87, 1
      %p91 = scmp.eq.s32.totalorder %s18, 3
      %p92 = scmp.ne.s32.totalorder %s87, %s89
      %p93 = scmp.eq.s32.totalorder %s18, 0
      %p94 = por %p92, %p93
      %p95 = scmp.ne.s32.totalorder %s87, %s89
      %p96 = scmp.eq.s32.totalorder %s23, 3
      %p97 = por %p95, %p96
      %p98 = scmp.ne.s32.totalorder %s89, %s90
      %p99 = scmp.eq.s32.totalorder %s23, 0
      %p100 = por %p98, %p99
      %p101 = scmp.ne.s32.totalorder %s89, %s90
      %p102 = scmp.eq.s32.totalorder %s24, 3
      %p103 = por %p101, %p102
      %p105 = scmp.ne.s32.totalorder %s90, %s104
      %p106 = scmp.eq.s32.totalorder %s24, 0
      %p107 = por %p105, %p106
      %s109 = sadd.s32 %s108, 1
      %p112 = scmp.eq.s32.totalorder %s18, 3
      %p113 = scmp.ne.s32.totalorder %s108, %s110
      %p114 = scmp.eq.s32.totalorder %s18, 0
      %p115 = por %p113, %p114
      %p116 = scmp.ne.s32.totalorder %s108, %s110
      %p117 = scmp.eq.s32.totalorder %s23, 3
      %p118 = por %p116, %p117
      %p119 = scmp.ne.s32.totalorder %s110, %s111
      %p120 = scmp.eq.s32.totalorder %s23, 0
      %p121 = por %p119, %p120
      %p122 = scmp.ne.s32.totalorder %s110, %s111
      %p123 = scmp.eq.s32.totalorder %s24, 3
      %p124 = por %p122, %p123
      %p126 = scmp.ne.s32.totalorder %s111, %s125
      %p127 = scmp.eq.s32.totalorder %s24, 0
      %p128 = por %p126, %p127
      %s130 = sadd.s32 %s129, 1
      %p133 = scmp.eq.s32.totalorder %s18, 3
      %p134 = scmp.ne.s32.totalorder %s129, %s131
      %p135 = scmp.eq.s32.totalorder %s18, 0
      %p136 = por %p134, %p135
      %p137 = scmp.ne.s32.totalorder %s129, %s131
      %p138 = scmp.eq.s32.totalorder %s23, 3
      %p139 = por %p137, %p138
      %p140 = scmp.ne.s32.totalorder %s131, %s132
      %p141 = scmp.eq.s32.totalorder %s23, 0
      %p142 = por %p140, %p141
      %p143 = scmp.ne.s32.totalorder %s131, %s132
      %p144 = scmp.eq.s32.totalorder %s24, 3
      %p145 = por %p143, %p144
      %p147 = scmp.ne.s32.totalorder %s132, %s146
      %p148 = scmp.eq.s32.totalorder %s24, 0
      %p149 = por %p147, %p148
      %s150 = ssub.s32 %s25, %s37
      %p151 = scmp.eq.s32.totalorder %s150, 0
      %s153 = sadd.s32 %s152, 1
      %s154 = scalar_select %p151, %s152, %s153
      %p157 = pneg %p151
      %p158 = scmp.eq.s32.totalorder %s18, 3
      %p159 = por %p157, %p158
      %p160 = scmp.ne.s32.totalorder %s152, %s155
      %p161 = scmp.eq.s32.totalorder %s18, 0
      %p162 = por %p160, %p161
      %p163 = scmp.ne.s32.totalorder %s152, %s155
      %p164 = scmp.eq.s32.totalorder %s23, 3
      %p165 = por %p163, %p164
      %p166 = scmp.ne.s32.totalorder %s155, %s156
      %p167 = scmp.eq.s32.totalorder %s23, 0
      %p168 = por %p166, %p167
      %p169 = scmp.ne.s32.totalorder %s155, %s156
      %p170 = scmp.eq.s32.totalorder %s24, 3
      %p171 = por %p169, %p170
      %p173 = scmp.ne.s32.totalorder %s156, %s172
      %p174 = scmp.eq.s32.totalorder %s24, 0
      %p175 = por %p173, %p174
      %p176 = scmp.le.s32.totalorder 1, %s18
      %p177 = scmp.lt.s32.totalorder %s18, 5
      %p178 = pnand %p176, %p177
      %p179 = pneg %p178
      // Predicated region
      $region9: #{tpu_custom_call.1} parent=5 // pred_check
        _
      $region10: #{tpu_custom_call.1} parent=5 // pred_check_branch
        %181 = sbr.rel (%p178) target = $region12
      $region11: #{tpu_custom_call.1} parent=5 // pred_region
        %s182 = ssub.s32 %s18, 1
        // Predicated region
        $region13: #{tpu_custom_call.1} parent=11 // pred_check
          %p183 = pneg %p79
        $region14: #{tpu_custom_call.1} parent=11 // pred_check_branch
          %185 = sbr.rel (%p183) target = $region16
        $region15: #{tpu_custom_call.1} parent=11 // pred_region
          _
        $region16: #{tpu_custom_call.1} parent=11 // pred_fallthru
          _
        // Predicated region
        $region17: #{tpu_custom_call.1} parent=11 // pred_check
          %p186 = pneg %p100
        $region18: #{tpu_custom_call.1} parent=11 // pred_check_branch
          %188 = sbr.rel (%p186) target = $region20
        $region19: #{tpu_custom_call.1} parent=11 // pred_region
          _
        $region20: #{tpu_custom_call.1} parent=11 // pred_fallthru
          _
        // Predicated region
        $region21: #{tpu_custom_call.1} parent=11 // pred_check
          %p189 = pneg %p121
        $region22: #{tpu_custom_call.1} parent=11 // pred_check_branch
          %191 = sbr.rel (%p189) target = $region24
        $region23: #{tpu_custom_call.1} parent=11 // pred_region
          %s193 = ssub.s32 512, 512
          %194 = vsyncadd [#allocation7], %s193
          %s195 = sshll.u32 [#allocation6], 4
          %s196 = int_to_ptr.vmem [resolvable:$true] %s195
          %201 = dma.hbm_to_vmem [thread:$0]  %s3, 512, %s196, [#allocation7], 128, 128, 8
        $region24: #{tpu_custom_call.1} parent=11 // pred_fallthru
          _
        // Predicated region
        $region25: #{tpu_custom_call.1} parent=11 // pred_check
          %p202 = pneg %p142
        $region26: #{tpu_custom_call.1} parent=11 // pred_check_branch
          %204 = sbr.rel (%p202) target = $region28
        $region27: #{tpu_custom_call.1} parent=11 // pred_region
          %s206 = ssub.s32 512, 512
          %207 = vsyncadd [#allocation7], %s206
          %s208 = sshll.u32 [#allocation8], 4
          %s209 = int_to_ptr.vmem [resolvable:$true] %s208
          %214 = dma.hbm_to_vmem [thread:$0]  %s4, 512, %s209, [#allocation7], 128, 128, 8
        $region28: #{tpu_custom_call.1} parent=11 // pred_fallthru
          _
      $region12: #{tpu_custom_call.1} parent=5 // pred_fallthru
        _
      %p215 = scmp.lt.s32.totalorder %s18, 4
      // Predicated region
      $region29: #{tpu_custom_call.1} parent=5 // pred_check
        %p216 = pneg %p215
      $region30: #{tpu_custom_call.1} parent=5 // pred_check_branch
        %218 = sbr.rel (%p216) target = $region32
      $region31: #{tpu_custom_call.1} parent=5 // pred_region
        // Predicated region
        $region33: #{tpu_custom_call.1} parent=31 // pred_check
          %p219 = pneg %p52
        $region34: #{tpu_custom_call.1} parent=31 // pred_check_branch
          %221 = sbr.rel (%p219) target = $region36
        $region35: #{tpu_custom_call.1} parent=31 // pred_region
          %s222 = sand.u32 %s42, 1
          %s223 = scalar_lea.sflag [#allocation4], %s222
          %s224 = sand.u32 %s42, 1
          %s225 = smul.addr %s224, 128
          %s226 = scalar_lea.vmem [#allocation3], %s225
          %s227 = smul.u32 8, %s26
          %s229 = ssub.s32 2048, 2048
          %230 = vsyncadd %s223, %s229
          %s231 = smul.addr %s227, 2
          %s232 = smul.addr %s25, 32
          %s233 = sadd.s32 %s231, %s232
          %s234 = smul.addr %s233, 128
          %s235 = scalar_lea.hbm %s0, %s234
          %s236 = sshll.u32 %s226, 4
          %s237 = int_to_ptr.vmem [resolvable:$true] %s236
          %242 = dma.hbm_to_vmem [thread:$0]  %s235, 2048, %s237, %s223, 128, 128, 8
        $region36: #{tpu_custom_call.1} parent=31 // pred_fallthru
          _
      $region32: #{tpu_custom_call.1} parent=5 // pred_fallthru
        _
      %p243 = scmp.le.s32.totalorder 1, %s18
      %p244 = scmp.lt.s32.totalorder %s18, 5
      %p245 = pnand %p243, %p244
      %p246 = pneg %p245
      // Predicated region
      $region37: #{tpu_custom_call.1} parent=5 // pred_check
        _
      $region38: #{tpu_custom_call.1} parent=5 // pred_check_branch
        %248 = sbr.rel (%p245) target = $region40
      $region39: #{tpu_custom_call.1} parent=5 // pred_region
        %s249 = ssub.s32 %s18, 1
        %s250 = sand.u32 %s45, 1
        %s251 = scalar_lea.sflag [#allocation4], %s250
        %s252 = sand.u32 %s45, 1
        %s253 = smul.addr %s252, 128
        %s254 = scalar_lea.vmem [#allocation3], %s253
        // Predicated region
        $region41: #{tpu_custom_call.1} parent=39 // pred_check
          %p255 = pneg %p58
        $region42: #{tpu_custom_call.1} parent=39 // pred_check_branch
          %257 = sbr.rel (%p255) target = $region44
        $region43: #{tpu_custom_call.1} parent=39 // pred_region
          %258 = dma.done %s251, 2048
        $region44: #{tpu_custom_call.1} parent=39 // pred_fallthru
          _
        // Predicated region
        $region45: #{tpu_custom_call.1} parent=39 // pred_check
          %p259 = pneg %p121
        $region46: #{tpu_custom_call.1} parent=39 // pred_check_branch
          %261 = sbr.rel (%p259) target = $region48
        $region47: #{tpu_custom_call.1} parent=39 // pred_region
          %262 = dma.done [#allocation7], 512
        $region48: #{tpu_custom_call.1} parent=39 // pred_fallthru
          _
        // Predicated region
        $region49: #{tpu_custom_call.1} parent=39 // pred_check
          %p263 = pneg %p142
        $region50: #{tpu_custom_call.1} parent=39 // pred_check_branch
          %265 = sbr.rel (%p263) target = $region52
        $region51: #{tpu_custom_call.1} parent=39 // pred_region
          %266 = dma.done [#allocation7], 512
        $region52: #{tpu_custom_call.1} parent=39 // pred_fallthru
          _
        %s267 = sand.u32 %s45, 1
        %s268 = scalar_lea.sflag [#allocation4], %s267
        %s269 = sand.u32 %s45, 1
        %s270 = smul.addr %s269, 128
        %s271 = scalar_lea.vmem [#allocation3], %s270
        %p272 = pneg %p58
        %p273 = pneg %p55
        %p274 = pneg %p79
        %p275 = pneg %p76
        %p276 = pneg %p100
        %p277 = pneg %p97
        %p278 = pneg %p121
        %p279 = pneg %p118
        %p280 = pneg %p142
        %p281 = pneg %p139
        %p282 = pneg %p168
        %p283 = pneg %p165
        %s284 = sand.u32 %s155, 1
        %s285 = scalar_lea.sflag [#allocation5], %s284
        %s286 = sand.u32 %s155, 1
        %s287 = smul.addr %s286, 2
        %s288 = scalar_lea.vmem [#allocation9], %s287
        %s289 = smul.u32 8, %s28
        %p290 = scmp.eq.s32.totalorder %s28, 0
        // Predicated region
        $region53: #{tpu_custom_call.1} parent=39 // pred_check
          %p291 = pneg %p290
        $region54: #{tpu_custom_call.1} parent=39 // pred_check_branch
          %293 = sbr.rel (%p291) target = $region56
        $region55: #{tpu_custom_call.1} parent=39 // pred_region
          %vm294 = vcmask 254976
          %295 = vst.msk [vmem:[#allocation2] sm:$0x3] %vm294, 0.0
        $region56: #{tpu_custom_call.1} parent=39 // pred_fallthru
          _
        %v296 = vld [vmem:[%s254] sm:$0xff]
        %v297 = vld [vmem:[%s254 + $0x8] sm:$0xff]
        %v298 = vld [vmem:[%s254 + $0x10] sm:$0xff]
        %v299 = vld [vmem:[%s254 + $0x18] sm:$0xff]
        %v300 = vld [vmem:[%s254 + $0x20] sm:$0xff]
        %v301 = vld [vmem:[%s254 + $0x28] sm:$0xff]
        %v302 = vld [vmem:[%s254 + $0x30] sm:$0xff]
        %v303 = vld [vmem:[%s254 + $0x38] sm:$0xff]
        %v304 = vld [vmem:[%s254 + $0x40] sm:$0xff]
        %v305 = vld [vmem:[%s254 + $0x48] sm:$0xff]
        %v306 = vld [vmem:[%s254 + $0x50] sm:$0xff]
        %v307 = vld [vmem:[%s254 + $0x58] sm:$0xff]
        %v308 = vld [vmem:[%s254 + $0x60] sm:$0xff]
        %v309 = vld [vmem:[%s254 + $0x68] sm:$0xff]
        %v310 = vld [vmem:[%s254 + $0x70] sm:$0xff]
        %v311 = vld [vmem:[%s254 + $0x78] sm:$0xff]
        %vm312 = vcmask 261120
        %v313 = vsel %vm312, %v296, 0.0
        %v314 = vsel %vm312, %v297, 0.0
        %v315 = vadd.f32 %v313, %v314
        %v316 = vsel %vm312, %v298, 0.0
        %v317 = vadd.f32 %v315, %v316
        %v318 = vsel %vm312, %v299, 0.0
        %v319 = vadd.f32 %v317, %v318
        %v320 = vsel %vm312, %v300, 0.0
        %v321 = vadd.f32 %v319, %v320
        %v322 = vsel %vm312, %v301, 0.0
        %v323 = vadd.f32 %v321, %v322
        %v324 = vsel %vm312, %v302, 0.0
        %v325 = vadd.f32 %v323, %v324
        %v326 = vsel %vm312, %v303, 0.0
        %v327 = vadd.f32 %v325, %v326
        %v328 = vsel %vm312, %v304, 0.0
        %v329 = vadd.f32 %v327, %v328
        %v330 = vsel %vm312, %v305, 0.0
        %v331 = vadd.f32 %v329, %v330
        %v332 = vsel %vm312, %v306, 0.0
        %v333 = vadd.f32 %v331, %v332
        %v334 = vsel %vm312, %v307, 0.0
        %v335 = vadd.f32 %v333, %v334
        %v336 = vsel %vm312, %v308, 0.0
        %v337 = vadd.f32 %v335, %v336
        %v338 = vsel %vm312, %v309, 0.0
        %v339 = vadd.f32 %v337, %v338
        %v340 = vsel %vm312, %v310, 0.0
        %v341 = vadd.f32 %v339, %v340
        %v342 = vsel %vm312, %v311, 0.0
        %v343 = vadd.f32 %v341, %v342
        %v344 = vrot.slane %v343, 4
        %v345 = vadd.f32 %v343, %v344
        %v346 = vrot.slane %v345, 2
        %v347 = vadd.f32 %v345, %v346
        %v348 = vrot.slane %v347, 1
        %v349 = vadd.f32 %v347, %v348
        %v350 = vmul.f32 %v296, %v296
        %v351 = vmul.f32 %v297, %v297
        %v352 = vmul.f32 %v298, %v298
        %v353 = vmul.f32 %v299, %v299
        %v354 = vmul.f32 %v300, %v300
        %v355 = vmul.f32 %v301, %v301
        %v356 = vmul.f32 %v302, %v302
        %v357 = vmul.f32 %v303, %v303
        %v358 = vmul.f32 %v304, %v304
        %v359 = vmul.f32 %v305, %v305
        %v360 = vmul.f32 %v306, %v306
        %v361 = vmul.f32 %v307, %v307
        %v362 = vmul.f32 %v308, %v308
        %v363 = vmul.f32 %v309, %v309
        %v364 = vmul.f32 %v310, %v310
        %v365 = vmul.f32 %v311, %v311
        %v366 = vsel %vm312, %v350, 0.0
        %v367 = vsel %vm312, %v351, 0.0
        %v368 = vadd.f32 %v366, %v367
        %v369 = vsel %vm312, %v352, 0.0
        %v370 = vadd.f32 %v368, %v369
        %v371 = vsel %vm312, %v353, 0.0
        %v372 = vadd.f32 %v370, %v371
        %v373 = vsel %vm312, %v354, 0.0
        %v374 = vadd.f32 %v372, %v373
        %v375 = vsel %vm312, %v355, 0.0
        %v376 = vadd.f32 %v374, %v375
        %v377 = vsel %vm312, %v356, 0.0
        %v378 = vadd.f32 %v376, %v377
        %v379 = vsel %vm312, %v357, 0.0
        %v380 = vadd.f32 %v378, %v379
        %v381 = vsel %vm312, %v358, 0.0
        %v382 = vadd.f32 %v380, %v381
        %v383 = vsel %vm312, %v359, 0.0
        %v384 = vadd.f32 %v382, %v383
        %v385 = vsel %vm312, %v360, 0.0
        %v386 = vadd.f32 %v384, %v385
        %v387 = vsel %vm312, %v361, 0.0
        %v388 = vadd.f32 %v386, %v387
        %v389 = vsel %vm312, %v362, 0.0
        %v390 = vadd.f32 %v388, %v389
        %v391 = vsel %vm312, %v363, 0.0
        %v392 = vadd.f32 %v390, %v391
        %v393 = vsel %vm312, %v364, 0.0
        %v394 = vadd.f32 %v392, %v393
        %v395 = vsel %vm312, %v365, 0.0
        %v396 = vadd.f32 %v394, %v395
        %v397 = vrot.slane %v396, 4
        %v398 = vadd.f32 %v396, %v397
        %v399 = vrot.slane %v398, 2
        %v400 = vadd.f32 %v398, %v399
        %v401 = vrot.slane %v400, 1
        %v402 = vadd.f32 %v400, %v401
        %v403 = vld [vmem:[#allocation2] sm:$0x3]
        %vm404 = vcmask 1040384
        %v405 = vsel %vm404, %v349, %v402
        %v406 = vadd.f32 %v403, %v405
        %vm407 = vcmask 254976
        %408 = vst.msk [vmem:[#allocation2] sm:$0x3] %vm407, %v406
        %p409 = scmp.eq.s32.totalorder %s28, 1
        // Predicated region
        $region57: #{tpu_custom_call.1} parent=39 // pred_check
          %p410 = pneg %p409
        $region58: #{tpu_custom_call.1} parent=39 // pred_check_branch
          %412 = sbr.rel (%p410) target = $region60
        $region59: #{tpu_custom_call.1} parent=39 // pred_region
          %v413 = vld [vmem:[#allocation2] sm:$0x3]
          %v414 = vld [vmem:[#allocation6] sm:$0xff]
          %v415 = vld [vmem:[#allocation6 + $0x8] sm:$0xff]
          %v416 = vld [vmem:[#allocation6 + $0x10] sm:$0xff]
          %v417 = vld [vmem:[#allocation6 + $0x18] sm:$0xff]
          %v419 = vsel %vm312, %v413, 0
          %421 = vmatprep.subr.mxu0 0.0
          %422 = vmatpush1.msra.mxu0 %v414
          %423 = vmatprep.subr.mxu0 0.0
          %424 = vmatpush1.msra.mxu0 %v415
          %425 = vmatprep.subr.mxu0 0.0
          %426 = vmatpush1.msra.mxu0 %v416
          %427 = vmatprep.subr.mxu0 0.0
          %428 = vmatpush1.msra.mxu0 %v417
          %429 = vmatprep.subr.mxu0 0.0
          %430 = vmatpush1.msra.mxu0 0.0
          %431 = vmatprep.subr.mxu0 0.0
          %432 = vmatpush1.msra.mxu0 0.0
          %433 = vmatprep.subr.mxu0 0.0
          %434 = vmatpush1.msra.mxu0 0.0
          %435 = vmatprep.subr.mxu0 0.0
          %436 = vmatpush1.msra.mxu0 0.0
          %437 = vmatprep.subr.mxu0 0.0
          %438 = vmatpush1.msra.mxu0 0.0
          %439 = vmatprep.subr.mxu0 0.0
          %440 = vmatpush1.msra.mxu0 0.0
          %441 = vmatprep.subr.mxu0 0.0
          %442 = vmatpush1.msra.mxu0 0.0
          %443 = vmatprep.subr.mxu0 0.0
          %444 = vmatpush1.msra.mxu0 0.0
          %445 = vmatprep.subr.mxu0 0.0
          %446 = vmatpush1.msra.mxu0 0.0
          %447 = vmatprep.subr.mxu0 0.0
          %448 = vmatpush1.msra.mxu0 0.0
          %449 = vmatprep.subr.mxu0 0.0
          %450 = vmatpush1.msra.mxu0 0.0
          %451 = vmatprep.subr.mxu0 0.0
          %452 = vmatpush1.msra.mxu0 0.0
          %453 = vmatprep.subr.mxu0 0.0
          %454 = vmatpush1.msra.mxu0 0.0
          %455 = vmatprep.subr.mxu0 0.0
          %456 = vmatpush1.msra.mxu0 0.0
          %457 = vmatprep.subr.mxu0 0.0
          %458 = vmatpush1.msra.mxu0 0.0
          %459 = vmatprep.subr.mxu0 0.0
          %460 = vmatpush1.msra.mxu0 0.0
          %461 = vmatprep.subr.mxu0 0.0
          %462 = vmatpush1.msra.mxu0 0.0
          %463 = vmatprep.subr.mxu0 0.0
          %464 = vmatpush1.msra.mxu0 0.0
          %465 = vmatprep.subr.mxu0 0.0
          %466 = vmatpush1.msra.mxu0 0.0
          %467 = vmatprep.subr.mxu0 0.0
          %468 = vmatpush1.msra.mxu0 0.0
          %469 = vmatprep.subr.mxu0 0.0
          %470 = vmatpush1.msra.mxu0 0.0
          %471 = vmatprep.subr.mxu0 0.0
          %472 = vmatpush1.msra.mxu0 0.0
          %473 = vmatprep.subr.mxu0 0.0
          %474 = vmatpush1.msra.mxu0 0.0
          %475 = vmatprep.subr.mxu0 0.0
          %476 = vmatpush1.msra.mxu0 0.0
          %477 = vmatprep.subr.mxu0 0.0
          %478 = vmatpush1.msra.mxu0 0.0
          %479 = vmatprep.subr.mxu0 0.0
          %480 = vmatpush1.msra.mxu0 0.0
          %481 = vmatprep.subr.mxu0 0.0
          %482 = vmatpush1.msra.mxu0 0.0
          %483 = vmatprep.subr.mxu0 0.0
          %484 = vmatpush1.msra.mxu0 0.0
          %485 = vmatprep.mubr.f32.mxu0 0.0
          %486 = vmatmul.mubr.f32.gmra.mrb[0].mxu0 %v419
          %v487 = vpop.f32.mrb[0].mxu0
          %v488 = vadd.f32 0.0, %v487
          %v489 = vpop.f32.mrb[0].mxu0
          %490 = vdwg.mxu0
          %v491 = vrcp.pop 256.0
          %v492 = vmul.f32 %v488, %v491
          %v493 = vmul.f32 %v492, %v492
          %v495 = vrot.slane %v493, 7
          %v497 = vsub.f32 %v492, %v495
          %v498 = vmax.f32 %v497, 0.0
          %v499 = vadd.f32 %v498, 1e-06
          %v500 = vrsqrt.pop %v499
          %v501 = vsel %vm404, %v492, %v500
          %v502 = vld [vmem:[#allocation8] sm:$0xff]
          %v503 = vld [vmem:[#allocation8 + $0x8] sm:$0xff]
          %v504 = vld [vmem:[#allocation8 + $0x10] sm:$0xff]
          %v505 = vld [vmem:[#allocation8 + $0x18] sm:$0xff]
          %v507 = vsel %vm312, %v501, 0
          %509 = vmatprep.subr.mxu0 0.0
          %510 = vmatpush1.msra.mxu0 %v502
          %511 = vmatprep.subr.mxu0 0.0
          %512 = vmatpush1.msra.mxu0 %v503
          %513 = vmatprep.subr.mxu0 0.0
          %514 = vmatpush1.msra.mxu0 %v504
          %515 = vmatprep.subr.mxu0 0.0
          %516 = vmatpush1.msra.mxu0 %v505
          %517 = vmatprep.subr.mxu0 0.0
          %518 = vmatpush1.msra.mxu0 0.0
          %519 = vmatprep.subr.mxu0 0.0
          %520 = vmatpush1.msra.mxu0 0.0
          %521 = vmatprep.subr.mxu0 0.0
          %522 = vmatpush1.msra.mxu0 0.0
          %523 = vmatprep.subr.mxu0 0.0
          %524 = vmatpush1.msra.mxu0 0.0
          %525 = vmatprep.subr.mxu0 0.0
          %526 = vmatpush1.msra.mxu0 0.0
          %527 = vmatprep.subr.mxu0 0.0
          %528 = vmatpush1.msra.mxu0 0.0
          %529 = vmatprep.subr.mxu0 0.0
          %530 = vmatpush1.msra.mxu0 0.0
          %531 = vmatprep.subr.mxu0 0.0
          %532 = vmatpush1.msra.mxu0 0.0
          %533 = vmatprep.subr.mxu0 0.0
          %534 = vmatpush1.msra.mxu0 0.0
          %535 = vmatprep.subr.mxu0 0.0
          %536 = vmatpush1.msra.mxu0 0.0
          %537 = vmatprep.subr.mxu0 0.0
          %538 = vmatpush1.msra.mxu0 0.0
          %539 = vmatprep.subr.mxu0 0.0
          %540 = vmatpush1.msra.mxu0 0.0
          %541 = vmatprep.subr.mxu0 0.0
          %542 = vmatpush1.msra.mxu0 0.0
          %543 = vmatprep.subr.mxu0 0.0
          %544 = vmatpush1.msra.mxu0 0.0
          %545 = vmatprep.subr.mxu0 0.0
          %546 = vmatpush1.msra.mxu0 0.0
          %547 = vmatprep.subr.mxu0 0.0
          %548 = vmatpush1.msra.mxu0 0.0
          %549 = vmatprep.subr.mxu0 0.0
          %550 = vmatpush1.msra.mxu0 0.0
          %551 = vmatprep.subr.mxu0 0.0
          %552 = vmatpush1.msra.mxu0 0.0
          %553 = vmatprep.subr.mxu0 0.0
          %554 = vmatpush1.msra.mxu0 0.0
          %555 = vmatprep.subr.mxu0 0.0
          %556 = vmatpush1.msra.mxu0 0.0
          %557 = vmatprep.subr.mxu0 0.0
          %558 = vmatpush1.msra.mxu0 0.0
          %559 = vmatprep.subr.mxu0 0.0
          %560 = vmatpush1.msra.mxu0 0.0
          %561 = vmatprep.subr.mxu0 0.0
          %562 = vmatpush1.msra.mxu0 0.0
          %563 = vmatprep.subr.mxu0 0.0
          %564 = vmatpush1.msra.mxu0 0.0
          %565 = vmatprep.subr.mxu0 0.0
          %566 = vmatpush1.msra.mxu0 0.0
          %567 = vmatprep.subr.mxu0 0.0
          %568 = vmatpush1.msra.mxu0 0.0
          %569 = vmatprep.subr.mxu0 0.0
          %570 = vmatpush1.msra.mxu0 0.0
          %571 = vmatprep.subr.mxu0 0.0
          %572 = vmatpush1.msra.mxu0 0.0
          %573 = vmatprep.mubr.f32.mxu0 0.0
          %574 = vmatmul.mubr.f32.gmra.mrb[0].mxu0 %v507
          %v575 = vpop.f32.mrb[0].mxu0
          %v576 = vadd.f32 0.0, %v575
          %v577 = vpop.f32.mrb[0].mxu0
          %578 = vdwg.mxu0
          %v579 = vld [vmem:[%s1] sm:$0x1]
          %v581 = vlaneseq
          %v582 = vshrl.u32 %v581, 7
          %v583 = vsub.s32 0, %v582
          %v584 = vrot.slane %v579, %v583
          %v586 = vmul.f32 %v576, %v584
          %v587 = vld [vmem:[%s2] sm:$0x1]
          %v589 = vrot.slane %v586, 1
          %v591 = vmul.f32 %v576, %v589
          %v592 = vsub.f32 %v587, %v591
          %v594 = vlaneseq
          %v595 = vshrl.u32 %v594, 7
          %v596 = vsub.s32 0, %v595
          %v597 = vrot.slane %v592, %v596
          %v599 = vsel %vm404, %v589, %v597
          %600 = vst.msk [vmem:[%s288] sm:$0x3] %vm407, %v599
        $region60: #{tpu_custom_call.1} parent=39 // pred_fallthru
          _
        %s601 = sand.u32 %s155, 1
        %s602 = scalar_lea.sflag [#allocation5], %s601
        %s603 = sand.u32 %s155, 1
        %s604 = smul.addr %s603, 2
        %s605 = scalar_lea.vmem [#allocation9], %s604
        // Predicated region
        $region61: #{tpu_custom_call.1} parent=39 // pred_check
          %p606 = pneg %p165
        $region62: #{tpu_custom_call.1} parent=39 // pred_check_branch
          %608 = sbr.rel (%p606) target = $region64
        $region63: #{tpu_custom_call.1} parent=39 // pred_region
          %s610 = ssub.s32 32, 32
          %611 = vsyncadd %s602, %s610
          %s612 = smul.addr %s27, 32
          %s613 = scalar_lea.hbm %s5, %s612
          %s615 = sshll.u32 %s605, 4
          %s616 = int_to_ptr.vmem [resolvable:$true] %s615
          %618 = dma.vmem_to_hbm [thread:$0]  %s616, 32, %s613, %s602
        $region64: #{tpu_custom_call.1} parent=39 // pred_fallthru
          _
      $region40: #{tpu_custom_call.1} parent=5 // pred_fallthru
        _
      %p619 = scmp.le.s32.totalorder 2, %s18
      // Predicated region
      $region65: #{tpu_custom_call.1} parent=5 // pred_check
        %p620 = pneg %p619
      $region66: #{tpu_custom_call.1} parent=5 // pred_check_branch
        %622 = sbr.rel (%p620) target = $region68
      $region67: #{tpu_custom_call.1} parent=5 // pred_region
        %s623 = ssub.s32 %s18, 2
        // Predicated region
        $region69: #{tpu_custom_call.1} parent=67 // pred_check
          %p624 = pneg %p171
        $region70: #{tpu_custom_call.1} parent=67 // pred_check_branch
          %626 = sbr.rel (%p624) target = $region72
        $region71: #{tpu_custom_call.1} parent=67 // pred_region
          %s627 = sand.u32 %s156, 1
          %s628 = scalar_lea.sflag [#allocation5], %s627
          %s629 = sand.u32 %s156, 1
          %s630 = smul.addr %s629, 2
          %s631 = scalar_lea.vmem [#allocation9], %s630
          %632 = dma.done %s628, 32
        $region72: #{tpu_custom_call.1} parent=67 // pred_fallthru
          _
      $region68: #{tpu_custom_call.1} parent=5 // pred_fallthru
        _
    $region6: #{tpu_custom_call.1} parent=1 // loop_footer
      %s22 = sadd.s32 1, %s18
    $region7: #{tpu_custom_call.1} parent=1 // loop_footer_branch
      %17 = sbr.rel target = $region3
    $region8: #{tpu_custom_call.1} parent=1 // loop_exit
      _
    %633 = vsyncpa [#allocation4], 1
    %s634 = scalar_lea.sflag [#allocation4], 1
    %635 = vsyncpa %s634, 1
    %636 = vsyncpa [#allocation7], 1
    %637 = vsyncpa [#allocation5], 1
    %s638 = scalar_lea.sflag [#allocation5], 1
    %639 = vsyncpa %s638, 1

</llo_original>
